<compile_context>
chip_gen: v6e
topology: v6e:2x2x1
jax: 0.10.0
libtpu: 0.0.40
codegen_flags: <defaults>
</compile_context>

<pallas_src>
import functools

import jax
import jax.numpy as jnp
from jax import lax
from jax.experimental import pallas as pl
from jax.experimental.pallas import tpu as pltpu


def _round_up(x, m):
    return (x + m - 1) // m * m


def _arch_params():
    """(max Cout lane tile, vmem_limit_bytes) per TPU generation.

    Best-effort device query; falls back to conservative defaults (128-wide MXU tile,
    64 MiB budget) under AOT / mock-device setups.
    """
    try:
        kind = jax.devices()[0].device_kind.lower()
    except Exception:
        return 128, 64 * 1024 * 1024
    if "v7" in kind or "7x" in kind:
        return 256, 48 * 1024 * 1024          # 64 MiB physical VMEM per TC -> leave headroom
    if "v6" in kind:
        return 256, 64 * 1024 * 1024          # 128 MiB physical
    return 128, 64 * 1024 * 1024              # v5e/v5p/v4/older: 128x128 MXU


# --------------------------------------------------------------------------------------
# Kernels
# --------------------------------------------------------------------------------------
def _gemm_bn_relu_kernel(a_ref, b_ref, scale_ref, bias_ref, o_ref, *, apply_relu, tn):
    # Single-K-tile path: one fat MXU matmul, f32 register accumulation, fused BN + ReLU,
    # one lane-dense store. scale/bias are resident full-width vectors; slice our tile.
    off = pl.multiple_of(pl.program_id(1) * tn, 128)
    acc = jnp.dot(a_ref[...], b_ref[...], preferred_element_type=jnp.float32)
    y = acc * scale_ref[:, pl.ds(off, tn)] + bias_ref[:, pl.ds(off, tn)]
    if apply_relu:
        y = jnp.maximum(y, 0.0)
    o_ref[...] = y.astype(o_ref.dtype)


def _gemm_bn_relu_ksplit_kernel(a_ref, b_ref, scale_ref, bias_ref, o_ref, acc_ref,
                                *, apply_relu, tn):
    # K-split path only for very large K (bounds VMEM): accumulate per K tile, write once.
    k = pl.program_id(2)
    part = jnp.dot(a_ref[...], b_ref[...], preferred_element_type=jnp.float32)

    @pl.when(k == 0)
    def _():
        acc_ref[...] = part          # write first partial directly (no zero-init pass)

    @pl.when(k != 0)
    def _():
        acc_ref[...] += part

    @pl.when(k == pl.num_programs(2) - 1)
    def _():
        off = pl.multiple_of(pl.program_id(1) * tn, 128)
        y = acc_ref[...] * scale_ref[:, pl.ds(off, tn)] + bias_ref[:, pl.ds(off, tn)]
        if apply_relu:
            y = jnp.maximum(y, 0.0)
        o_ref[...] = y.astype(o_ref.dtype)


# --------------------------------------------------------------------------------------
# Public wrapper (NCHW in / NCHW out, PyTorch BasicConv.forward semantics)
# --------------------------------------------------------------------------------------
def basic_conv(x_nchw, weight_oihw, bn_gamma=None, bn_beta=None, bn_mean=None, bn_var=None,
               *, stride=1, padding=0, dilation=1, groups=1, relu=True, bn=True,
               eps=1e-5, tile_m=None, tile_n=None, tile_k=4608):
    """Pallas implementation of BasicConv.forward (Conv2d -> BN(eval) -> ReLU)."""
    assert groups == 1, "groups > 1 not supported"  # TODO(synk): grouped conv path

    N, Cin, H, W = x_nchw.shape
    Cout, Cin_w, KH, KW = weight_oihw.shape
    assert Cin_w == Cin

    Ho = (H + 2 * padding - dilation * (KH - 1) - 1) // stride + 1
    Wo = (W + 2 * padding - dilation * (KW - 1) - 1) // stride + 1

    M = N * Ho * Wo
    K = KH * KW * Cin
    out_bytes = jnp.dtype(x_nchw.dtype).itemsize

    # --------- generation-aware tile selection ----------------------------------------
    lane_tile, vmem_budget = _arch_params()

    # Cout tile: never pad small Cout (triplet-attention has Cout==1) to 256.
    tn = tile_n or min(lane_tile, _round_up(Cout, 128))
    cout_p = _round_up(Cout, tn)

    # M tile: 512 default, 1024 for large M; clamp for small M; keep >=2 grid points
    # so both v7x TensorCores (megacore) get work.
    tm = tile_m or (1024 if M >= 4096 else 512)
    if M < tm:
        tm = max(8, _round_up(M, 16))
    m_p = _round_up(M, tm)
    if (m_p // tm) * (cout_p // tn) < 2 and tm >= 16:
        tm = max(8, _round_up(tm // 2, 8))
        m_p = _round_up(M, tm)

    # K handling: derive the fat-K threshold from the VMEM budget so every standard
    # ResNet layer (K <= 3*3*512 = 4608) takes the single-fat-K path.
    fixed_vmem = 2 * tm * tn * out_bytes + tm * tn * 4 + 4 * cout_p * 4 * 2
    k_fat_max = (int(vmem_budget * 0.75) - fixed_vmem) // (2 * 2 * (tm + tn))  # bf16 A+B, dbuf
    k_fat_max = max(512, (k_fat_max // 128) * 128)

    if K <= k_fat_max:                         # common case: one fat K, no K grid axis
        k_p = _round_up(K, 128)                # lane/sublane aligned even for tiny Cin
        tk = k_p
        n_k = 1
    else:                                      # extreme K only: bound VMEM
        tk = max(128, min(_round_up(tile_k, 128), k_fat_max))
        k_p = _round_up(K, tk)
        n_k = k_p // tk

    # --------- wrapper glue: bf16 early, im2col written straight into padded A --------
    x_nhwc = jnp.transpose(x_nchw, (0, 2, 3, 1)).astype(jnp.bfloat16)
    x_pad = jnp.pad(x_nhwc, ((0, 0), (padding, padding), (padding, padding), (0, 0)))

    a = jnp.zeros((m_p, k_p), jnp.bfloat16)    # zero padding covers extra M rows / K cols
    for kh in range(KH):
        for kw in range(KW):
            h0, w0 = kh * dilation, kw * dilation
            tap = lax.slice(
                x_pad,
                (0, h0, w0, 0),
                (N, h0 + (Ho - 1) * stride + 1, w0 + (Wo - 1) * stride + 1, Cin),
                (1, stride, stride, 1)).reshape(M, Cin)
            a = lax.dynamic_update_slice(a, tap, (0, (kh * KW + kw) * Cin))
    # TODO(synk): for chained layers, move im2col in-kernel (memory_space=pl.ANY + DMA
    # gather of the KH*KW shifted windows) to avoid materializing A in HBM at all.

    b = jnp.transpose(weight_oihw, (2, 3, 1, 0)).reshape(K, Cout).astype(jnp.bfloat16)
    b = jnp.pad(b, ((0, k_p - K), (0, cout_p - Cout)))

    if bn:
        scale = (bn_gamma / jnp.sqrt(bn_var + eps)).astype(jnp.float32)
        bias = (bn_beta - bn_mean * scale).astype(jnp.float32)
    else:
        scale = jnp.ones((Cout,), jnp.float32)
        bias = jnp.zeros((Cout,), jnp.float32)
    scale = jnp.pad(scale, (0, cout_p - Cout)).reshape(1, cout_p)
    bias = jnp.pad(bias, (0, cout_p - Cout)).reshape(1, cout_p)

    grid_mn = (m_p // tm, cout_p // tn)

    if n_k == 1:
        kernel = functools.partial(_gemm_bn_relu_kernel, apply_relu=relu, tn=tn)
        grid = grid_mn
        in_specs = [
            pl.BlockSpec((tm, k_p), lambda i, j: (i, 0)),
            pl.BlockSpec((k_p, tn), lambda i, j: (0, j)),
            pl.BlockSpec((1, cout_p), lambda i, j: (0, 0)),   # resident, one DMA total
            pl.BlockSpec((1, cout_p), lambda i, j: (0, 0)),
        ]
        out_specs = pl.BlockSpec((tm, tn), lambda i, j: (i, j))
        scratch_shapes = []
        dims = ("parallel", "parallel")
    else:
        kernel = functools.partial(_gemm_bn_relu_ksplit_kernel, apply_relu=relu, tn=tn)
        grid = grid_mn + (n_k,)
        in_specs = [
            pl.BlockSpec((tm, tk), lambda i, j, k: (i, k)),
            pl.BlockSpec((tk, tn), lambda i, j, k: (k, j)),
            pl.BlockSpec((1, cout_p), lambda i, j, k: (0, 0)),
            pl.BlockSpec((1, cout_p), lambda i, j, k: (0, 0)),
        ]
        out_specs = pl.BlockSpec((tm, tn), lambda i, j, k: (i, j))
        scratch_shapes = [pltpu.VMEM((tm, tn), jnp.float32)]
        dims = ("parallel", "parallel", "arbitrary")

    out = pl.pallas_call(
        kernel,
        out_shape=jax.ShapeDtypeStruct((m_p, cout_p), x_nchw.dtype),
        grid_spec=pltpu.PrefetchScalarGridSpec(
            num_scalar_prefetch=0,
            grid=grid,
            in_specs=in_specs,
            out_specs=out_specs,
            scratch_shapes=scratch_shapes,
        ),
        compiler_params=pltpu.CompilerParams(
            dimension_semantics=dims,
            vmem_limit_bytes=vmem_budget,      # generation-aware budget; tiles sized under it
        ),
    )(a, b, scale, bias)

    # Wrapper glue: drop padding, restore NCHW (keep NHWC/bf16 instead when chaining).
    out = out[:M, :Cout].reshape(N, Ho, Wo, Cout)
    return jnp.transpose(out, (0, 3, 1, 2))


# --------------------------------------------------------------------------------------
# Reference + self-test
# --------------------------------------------------------------------------------------
def _reference(x, w, gamma, beta, mean, var, *, stride=1, padding=0, dilation=1,
               relu=True, bn=True, eps=1e-5):
    y = lax.conv_general_dilated(
        x, w, window_strides=(stride, stride),
        padding=[(padding, padding), (padding, padding)],
        rhs_dilation=(dilation, dilation),
        dimension_numbers=("NCHW", "OIHW", "NCHW"),
        precision=lax.Precision.HIGHEST,
    )
    if bn:
        scale = gamma / jnp.sqrt(var + eps)
        bias = beta - mean * scale
        y = y * scale.reshape(1, -1, 1, 1) + bias.reshape(1, -1, 1, 1)
    if relu:
        y = jnp.maximum(y, 0.0)
    return y


def _run_case(key, N, Cin, H, W, Cout, KH, KW, *, stride, padding, dilation, relu, bn):
    kx, kw = jax.random.split(key)
    x = jax.random.normal(kx, (N, Cin, H, W), dtype=jnp.float32)
    weight = jax.random.normal(kw, (Cout, Cin, KH, KW), dtype=jnp.float32) * 0.1

    bn_gamma = 1.0 + 0.05 * jnp.arange(Cout, dtype=jnp.float32)
    bn_beta = 0.01 * jnp.arange(Cout, dtype=jnp.float32)
    bn_mean = 0.02 * jnp.arange(Cout, dtype=jnp.float32)
    bn_var = 1.0 + 0.1 * jnp.arange(Cout, dtype=jnp.float32)

    out = basic_conv(x, weight, bn_gamma, bn_beta, bn_mean, bn_var,
                     stride=stride, padding=padding, dilation=dilation,
                     groups=1, relu=relu, bn=bn)
    out = jax.block_until_ready(out)

    # Reference with the same bf16 operand quantization as the kernel (f32 accumulation),
    # so only summation order differs.
    xq = x.astype(jnp.bfloat16).astype(jnp.float32)
    wq = weight.astype(jnp.bfloat16).astype(jnp.float32)
    ref = _reference(xq, wq, bn_gamma, bn_beta, bn_mean, bn_var,
                     stride=stride, padding=padding, dilation=dilation, relu=relu, bn=bn)

    Ho = (H + 2 * padding - dilation * (KH - 1) - 1) // stride + 1
    Wo = (W + 2 * padding - dilation * (KW - 1) - 1) // stride + 1
    assert out.shape == (N, Cout, Ho, Wo), out.shape
    max_err = float(jnp.max(jnp.abs(out - ref)))
    assert jnp.allclose(out, ref, atol=2e-2, rtol=2e-2), max_err


if __name__ == "__main__":
    key = jax.random.PRNGKey(0)
    k1, k2 = jax.random.split(key)

    # BasicConv(4, 8, kernel_size=3, padding=1) with BN + ReLU.
    _run_case(k1, N=2, Cin=4, H=16, W=16, Cout=8, KH=3, KW=3,
              stride=1, padding=1, dilation=1, relu=True, bn=True)

    # Triplet-attention spatial gate style: BasicConv(2, 1, 7, padding=3, relu=False).
    _run_case(k2, N=2, Cin=2, H=16, W=16, Cout=1, KH=7, KW=7,
              stride=1, padding=3, dilation=1, relu=False, bn=True)

    print("KERNEL_OK")
</pallas_src>

<mosaic_0001>
module attributes {stable_mosaic.version = 11 : i64} {
  func.func @_gemm_bn_relu_kernel(%arg0: i32, %arg1: i32, %arg2: memref<256x128xbf16, #tpu.memory_space<vmem>>, %arg3: memref<128x128xbf16, #tpu.memory_space<vmem>>, %arg4: memref<1x128xf32, #tpu.memory_space<vmem>>, %arg5: memref<1x128xf32, #tpu.memory_space<vmem>>, %arg6: memref<256x128xf32, #tpu.memory_space<vmem>>) attributes {dimension_semantics = [#tpu.dimension_semantics<parallel>, #tpu.dimension_semantics<parallel>], iteration_bounds = array<i64: 2, 1>, scalar_prefetch = 0 : i64, scratch_operands = 0 : i64, tpu.core_type = #tpu.core_type<tc>, window_params = [{transform_indices = @transform_0, window_bounds = array<i64: 256, 128>}, {transform_indices = @transform_1, window_bounds = array<i64: 128, 128>}, {pipeline_mode = #tpu.pipeline_mode<synchronous>, transform_indices = @transform_2, window_bounds = array<i64: 1, 128>}, {pipeline_mode = #tpu.pipeline_mode<synchronous>, transform_indices = @transform_3, window_bounds = array<i64: 1, 128>}, {transform_indices = @transform_4, window_bounds = array<i64: 256, 128>}]} {
    %c128_i32 = arith.constant 128 : i32
    %0 = arith.muli %arg1, %c128_i32 : i32
    %1 = tpu.assume_multiple %0, 128 : i32
    %c0 = arith.constant 0 : index
    %c0_0 = arith.constant 0 : index
    %2 = vector.load %arg2[%c0, %c0_0] : memref<256x128xbf16, #tpu.memory_space<vmem>>, vector<256x128xbf16>
    %c0_1 = arith.constant 0 : index
    %c0_2 = arith.constant 0 : index
    %3 = vector.load %arg3[%c0_1, %c0_2] : memref<128x128xbf16, #tpu.memory_space<vmem>>, vector<128x128xbf16>
    %cst = arith.constant dense<0.000000e+00> : vector<256x128xf32>
    %4 = tpu.matmul %2, %3, %cst {dimension_numbers = #tpu.dot_dimension_numbers<[1], [0], [0], [1], [0, 0, 1, 1], [], []>} : vector<256x128xbf16>, vector<128x128xbf16>, vector<256x128xf32> -> vector<256x128xf32>
    %c0_3 = arith.constant 0 : index
    %5 = arith.index_cast %1 : i32 to index
    %6 = vector.load %arg4[%c0_3, %5] : memref<1x128xf32, #tpu.memory_space<vmem>>, vector<1x128xf32>
    %7 = vector.broadcast %6 : vector<1x128xf32> to vector<256x128xf32>
    %8 = arith.mulf %4, %7 : vector<256x128xf32>
    %c0_4 = arith.constant 0 : index
    %9 = arith.index_cast %1 : i32 to index
    %10 = vector.load %arg5[%c0_4, %9] : memref<1x128xf32, #tpu.memory_space<vmem>>, vector<1x128xf32>
    %11 = vector.broadcast %10 : vector<1x128xf32> to vector<256x128xf32>
    %12 = arith.addf %8, %11 : vector<256x128xf32>
    %cst_5 = arith.constant 0.000000e+00 : f32
    %13 = vector.broadcast %cst_5 : f32 to vector<256x128xf32>
    %14 = arith.maximumf %12, %13 : vector<256x128xf32>
    %c0_6 = arith.constant 0 : index
    %c0_7 = arith.constant 0 : index
    %15 = vector.load %arg6[%c0_6, %c0_7] : memref<256x128xf32, #tpu.memory_space<vmem>>, vector<256x128xf32>
    tpu.vector_store %arg6[%c0_6, %c0_7], %14 {strides = array<i32>} : memref<256x128xf32, #tpu.memory_space<vmem>>, vector<256x128xf32>,
    return
  }
  func.func @transform_0(%arg0: i32, %arg1: i32) -> (i32, i32) {
    %c0_i32 = arith.constant 0 : i32
    %c0_i32_0 = arith.constant 0 : i32
    return %arg0, %c0_i32 : i32, i32
  }
  func.func @transform_1(%arg0: i32, %arg1: i32) -> (i32, i32) {
    %c0_i32 = arith.constant 0 : i32
    %c0_i32_0 = arith.constant 0 : i32
    return %c0_i32, %arg1 : i32, i32
  }
  func.func @transform_2(%arg0: i32, %arg1: i32) -> (i32, i32) {
    %c0_i32 = arith.constant 0 : i32
    %c0_i32_0 = arith.constant 0 : i32
    %c0_i32_1 = arith.constant 0 : i32
    return %c0_i32, %c0_i32_0 : i32, i32
  }
  func.func @transform_3(%arg0: i32, %arg1: i32) -> (i32, i32) {
    %c0_i32 = arith.constant 0 : i32
    %c0_i32_0 = arith.constant 0 : i32
    %c0_i32_1 = arith.constant 0 : i32
    return %c0_i32, %c0_i32_0 : i32, i32
  }
  func.func @transform_4(%arg0: i32, %arg1: i32) -> (i32, i32) {
    %c0_i32 = arith.constant 0 : i32
    return %arg0, %arg1 : i32, i32
  }
}

</mosaic_0001>

<llo_original>
// kernel: tpu_custom_call.1
$region0: #{tpu_custom_call.1}
  #allocation0 [shape = 'u32[]', space=smem, size = 0x4, offset = 0x4, fixed_abs, tag = 'smem constant byte address 0x4 - core index']
  #allocation1 [shape = 'u32[144,128]{1,0:T(1,128)}', space=vmem, size = 0x12000, scoped, tag = 'internal scratch']
  %s0 = inlined_call_operand.hbm [shape: bf16[512,128], index: 0, kind: input, shape index: {}]
  %s1 = inlined_call_operand.hbm [shape: bf16[128,128], index: 1, kind: input, shape index: {}]
  %s2 = inlined_call_operand.vmem [shape: f32[1,128], index: 2, kind: input, shape index: {}]
  %s3 = inlined_call_operand.vmem [shape: f32[1,128], index: 3, kind: input, shape index: {}]
  %s4 = inlined_call_operand.hbm [shape: f32[512,128], index: 4, kind: output, shape index: {}]
  %s5 = sld [smem:[#allocation0]]
  $region57: #{tpu_custom_call.1} parent=0
    _
  %s7 = ssub.s32 1, %s5
  %s8 = scalar_select 0, %s7, %s5
  $region1: #{tpu_custom_call.1} parent=0
    #allocation2 [shape = 'u8[131072]{0}', space=vmem, size = 0x20000, scoped, tag = 'input window, operand 0']
    #allocation3 [shape = 's32[2]{0}', space=sflag, size = 0x8, scoped, tag = 'scoped memory for tpu_custom_call.1']
    #allocation4 [shape = 's32[2]{0}', space=sflag, size = 0x8, scoped, tag = 'scoped memory for tpu_custom_call.1']
    #allocation5 [shape = 'u8[32768]{0}', space=vmem, size = 0x8000, scoped, tag = 'input window, operand 1, single buffered']
    #allocation6 [shape = 's32[1]{0}', space=sflag, size = 0x4, scoped, tag = 'scoped memory for tpu_custom_call.1']
    #allocation7 [shape = 'u8[262144]{0}', space=vmem, size = 0x40000, scoped, tag = 'output window, operand 0']
    %9 = vsyncpa [#allocation3], 0
    %s10 = scalar_lea.sflag [#allocation3], 1
    %11 = vsyncpa %s10, 0
    %12 = vsyncpa [#allocation6], 0
    %13 = vsyncpa [#allocation4], 0
    %s14 = scalar_lea.sflag [#allocation4], 1
    %15 = vsyncpa %s14, 0
    loop: start=0, step=1, limit=4
    $region2: #{tpu_custom_call.1} parent=1 // loop_pre_header
      _
    $region3: #{tpu_custom_call.1} parent=1 // loop_header
      %s17 = sphi 0, %s21
      %p18 = scmp.ge.s32.totalorder %s17, 4
      %s24 = sphi 0, %s36
      %s25 = sphi 0, %s32
      %s26 = sphi 0, %s24
      %s27 = sphi 0, %s25
      %s28 = sphi 0, %s26
      %s29 = sphi 0, %s27
      %s39 = sphi 0, %s41
      %s42 = sphi 0, %s39
      %s43 = sphi 0, %s42
      %s59 = sphi 0, %s43
      %s65 = sphi 0, %s67
      %s68 = sphi 0, %s65
      %s69 = sphi 0, %s68
      %s85 = sphi 0, %s69
      %s89 = sphi 0, %s89
      %s91 = sphi 0, %s89
      %s92 = sphi 0, %s91
      %s106 = sphi 0, %s92
      %s110 = sphi 0, %s110
      %s112 = sphi 0, %s110
      %s113 = sphi 0, %s112
      %s127 = sphi 0, %s113
      %s135 = sphi 0, %s137
      %s138 = sphi 0, %s135
      %s139 = sphi 0, %s138
      %s155 = sphi 0, %s139
    $region4: #{tpu_custom_call.1} parent=1 // loop_header_branch
      %20 = sbr.rel (%p18) target = $region8
    $region5: #{tpu_custom_call.1} parent=1 // loop_body
      %s22 = ssub.s32 %s17, 1
      %s23 = ssub.s32 %s17, 2
      %s30 = sadd.s32 1, %s25
      %p31 = scmp.ge.s32.totalorder %s30, 1
      %s32 = scalar_select %p31, 0, %s30
      %s33 = sadd.s32 1, %s24
      %s34 = scalar_select %p31, %s33, %s24
      %p35 = scmp.ge.s32.totalorder %s34, 2
      %s36 = scalar_select %p35, 0, %s34
      %s37 = ssub.s32 %s24, %s36
      %p38 = scmp.eq.s32.totalorder %s37, 0
      %s40 = sadd.s32 %s39, 1
      %s41 = scalar_select %p38, %s39, %s40
      %p44 = pneg %p38
      %p45 = scmp.eq.s32.totalorder %s17, 1
      %p46 = por %p44, %p45
      %p47 = scmp.ne.s32.totalorder %s39, %s42
      %p48 = scmp.eq.s32.totalorder %s17, 0
      %p49 = por %p47, %p48
      %p50 = scmp.ne.s32.totalorder %s39, %s42
      %p51 = scmp.eq.s32.totalorder %s22, 1
      %p52 = por %p50, %p51
      %p53 = scmp.ne.s32.totalorder %s42, %s43
      %p54 = scmp.eq.s32.totalorder %s22, 0
      %p55 = por %p53, %p54
      %p56 = scmp.ne.s32.totalorder %s42, %s43
      %p57 = scmp.eq.s32.totalorder %s23, 1
      %p58 = por %p56, %p57
      %p60 = scmp.ne.s32.totalorder %s43, %s59
      %p61 = scmp.eq.s32.totalorder %s23, 0
      %p62 = por %p60, %p61
      %s63 = ssub.s32 %s25, %s32
      %p64 = scmp.eq.s32.totalorder %s63, 0
      %s66 = sadd.s32 %s65, 1
      %s67 = scalar_select %p64, %s65, %s66
      %p70 = pneg %p64
      %p71 = scmp.eq.s32.totalorder %s17, 1
      %p72 = por %p70, %p71
      %p73 = scmp.ne.s32.totalorder %s65, %s68
      %p74 = scmp.eq.s32.totalorder %s17, 0
      %p75 = por %p73, %p74
      %p76 = scmp.ne.s32.totalorder %s65, %s68
      %p77 = scmp.eq.s32.totalorder %s22, 1
      %p78 = por %p76, %p77
      %p79 = scmp.ne.s32.totalorder %s68, %s69
      %p80 = scmp.eq.s32.totalorder %s22, 0
      %p81 = por %p79, %p80
      %p82 = scmp.ne.s32.totalorder %s68, %s69
      %p83 = scmp.eq.s32.totalorder %s23, 1
      %p84 = por %p82, %p83
      %p86 = scmp.ne.s32.totalorder %s69, %s85
      %p87 = scmp.eq.s32.totalorder %s23, 0
      %p88 = por %p86, %p87
      %s90 = sadd.s32 %s89, 1
      %p93 = scmp.eq.s32.totalorder %s17, 1
      %p94 = scmp.ne.s32.totalorder %s89, %s91
      %p95 = scmp.eq.s32.totalorder %s17, 0
      %p96 = por %p94, %p95
      %p97 = scmp.ne.s32.totalorder %s89, %s91
      %p98 = scmp.eq.s32.totalorder %s22, 1
      %p99 = por %p97, %p98
      %p100 = scmp.ne.s32.totalorder %s91, %s92
      %p101 = scmp.eq.s32.totalorder %s22, 0
      %p102 = por %p100, %p101
      %p103 = scmp.ne.s32.totalorder %s91, %s92
      %p104 = scmp.eq.s32.totalorder %s23, 1
      %p105 = por %p103, %p104
      %p107 = scmp.ne.s32.totalorder %s92, %s106
      %p108 = scmp.eq.s32.totalorder %s23, 0
      %p109 = por %p107, %p108
      %s111 = sadd.s32 %s110, 1
      %p114 = scmp.eq.s32.totalorder %s17, 1
      %p115 = scmp.ne.s32.totalorder %s110, %s112
      %p116 = scmp.eq.s32.totalorder %s17, 0
      %p117 = por %p115, %p116
      %p118 = scmp.ne.s32.totalorder %s110, %s112
      %p119 = scmp.eq.s32.totalorder %s22, 1
      %p120 = por %p118, %p119
      %p121 = scmp.ne.s32.totalorder %s112, %s113
      %p122 = scmp.eq.s32.totalorder %s22, 0
      %p123 = por %p121, %p122
      %p124 = scmp.ne.s32.totalorder %s112, %s113
      %p125 = scmp.eq.s32.totalorder %s23, 1
      %p126 = por %p124, %p125
      %p128 = scmp.ne.s32.totalorder %s113, %s127
      %p129 = scmp.eq.s32.totalorder %s23, 0
      %p130 = por %p128, %p129
      %s131 = ssub.s32 %s24, %s36
      %s132 = ssub.s32 %s25, %s32
      %s133 = sor.u32 %s131, %s132
      %p134 = scmp.eq.s32.totalorder %s133, 0
      %s136 = sadd.s32 %s135, 1
      %s137 = scalar_select %p134, %s135, %s136
      %p140 = pneg %p134
      %p141 = scmp.eq.s32.totalorder %s17, 1
      %p142 = por %p140, %p141
      %p143 = scmp.ne.s32.totalorder %s135, %s138
      %p144 = scmp.eq.s32.totalorder %s17, 0
      %p145 = por %p143, %p144
      %p146 = scmp.ne.s32.totalorder %s135, %s138
      %p147 = scmp.eq.s32.totalorder %s22, 1
      %p148 = por %p146, %p147
      %p149 = scmp.ne.s32.totalorder %s138, %s139
      %p150 = scmp.eq.s32.totalorder %s22, 0
      %p151 = por %p149, %p150
      %p152 = scmp.ne.s32.totalorder %s138, %s139
      %p153 = scmp.eq.s32.totalorder %s23, 1
      %p154 = por %p152, %p153
      %p156 = scmp.ne.s32.totalorder %s139, %s155
      %p157 = scmp.eq.s32.totalorder %s23, 0
      %p158 = por %p156, %p157
      %p159 = scmp.le.s32.totalorder 1, %s17
      %p160 = scmp.lt.s32.totalorder %s17, 3
      %p161 = pnand %p159, %p160
      %p162 = pneg %p161
      // Predicated region
      $region9: #{tpu_custom_call.1} parent=5 // pred_check
        _
      $region10: #{tpu_custom_call.1} parent=5 // pred_check_branch
        %164 = sbr.rel (%p161) target = $region12
      $region11: #{tpu_custom_call.1} parent=5 // pred_region
        %s165 = ssub.s32 %s17, 1
        // Predicated region
        $region13: #{tpu_custom_call.1} parent=11 // pred_check
          %p166 = pneg %p81
        $region14: #{tpu_custom_call.1} parent=11 // pred_check_branch
          %168 = sbr.rel (%p166) target = $region16
        $region15: #{tpu_custom_call.1} parent=11 // pred_region
          %s170 = ssub.s32 1024, 1024
          %171 = vsyncadd [#allocation6], %s170
          %s172 = smul.addr %s27, 64
          %s173 = scalar_lea.hbm %s1, %s172
          %s174 = sshll.u32 [#allocation5], 4
          %s175 = int_to_ptr.vmem [resolvable:$true] %s174
          %180 = dma.hbm_to_vmem [thread:$0]  %s173, 1024, %s175, [#allocation6], 64, 64, 4
        $region16: #{tpu_custom_call.1} parent=11 // pred_fallthru
          _
        // Predicated region
        $region17: #{tpu_custom_call.1} parent=11 // pred_check
          %p181 = pneg %p102
        $region18: #{tpu_custom_call.1} parent=11 // pred_check_branch
          %183 = sbr.rel (%p181) target = $region20
        $region19: #{tpu_custom_call.1} parent=11 // pred_region
          _
        $region20: #{tpu_custom_call.1} parent=11 // pred_fallthru
          _
        // Predicated region
        $region21: #{tpu_custom_call.1} parent=11 // pred_check
          %p184 = pneg %p123
        $region22: #{tpu_custom_call.1} parent=11 // pred_check_branch
          %186 = sbr.rel (%p184) target = $region24
        $region23: #{tpu_custom_call.1} parent=11 // pred_region
          _
        $region24: #{tpu_custom_call.1} parent=11 // pred_fallthru
          _
      $region12: #{tpu_custom_call.1} parent=5 // pred_fallthru
        _
      %p187 = scmp.lt.s32.totalorder %s17, 2
      // Predicated region
      $region25: #{tpu_custom_call.1} parent=5 // pred_check
        %p188 = pneg %p187
      $region26: #{tpu_custom_call.1} parent=5 // pred_check_branch
        %190 = sbr.rel (%p188) target = $region28
      $region27: #{tpu_custom_call.1} parent=5 // pred_region
        // Predicated region
        $region29: #{tpu_custom_call.1} parent=27 // pred_check
          %p191 = pneg %p49
        $region30: #{tpu_custom_call.1} parent=27 // pred_check_branch
          %193 = sbr.rel (%p191) target = $region32
        $region31: #{tpu_custom_call.1} parent=27 // pred_region
          %s194 = sand.u32 %s39, 1
          %s195 = scalar_lea.sflag [#allocation3], %s194
          %s196 = sand.u32 %s39, 1
          %s197 = smul.addr %s196, 128
          %s198 = scalar_lea.vmem [#allocation2], %s197
          %s199 = smul.u32 32, %s24
          %s201 = ssub.s32 2048, 2048
          %202 = vsyncadd %s195, %s201
          %s203 = smul.addr %s199, 64
          %s204 = scalar_lea.hbm %s0, %s203
          %s205 = sshll.u32 %s198, 4
          %s206 = int_to_ptr.vmem [resolvable:$true] %s205
          %211 = dma.hbm_to_vmem [thread:$0]  %s204, 2048, %s206, %s195, 64, 64, 4
        $region32: #{tpu_custom_call.1} parent=27 // pred_fallthru
          _
      $region28: #{tpu_custom_call.1} parent=5 // pred_fallthru
        _
      %p212 = scmp.le.s32.totalorder 1, %s17
      %p213 = scmp.lt.s32.totalorder %s17, 3
      %p214 = pnand %p212, %p213
      %p215 = pneg %p214
      // Predicated region
      $region33: #{tpu_custom_call.1} parent=5 // pred_check
        _
      $region34: #{tpu_custom_call.1} parent=5 // pred_check_branch
        %217 = sbr.rel (%p214) target = $region36
      $region35: #{tpu_custom_call.1} parent=5 // pred_region
        %s218 = ssub.s32 %s17, 1
        %s219 = sand.u32 %s42, 1
        %s220 = scalar_lea.sflag [#allocation3], %s219
        %s221 = sand.u32 %s42, 1
        %s222 = smul.addr %s221, 128
        %s223 = scalar_lea.vmem [#allocation2], %s222
        // Predicated region
        $region37: #{tpu_custom_call.1} parent=35 // pred_check
          %p224 = pneg %p55
        $region38: #{tpu_custom_call.1} parent=35 // pred_check_branch
          %226 = sbr.rel (%p224) target = $region40
        $region39: #{tpu_custom_call.1} parent=35 // pred_region
          %227 = dma.done %s220, 2048
        $region40: #{tpu_custom_call.1} parent=35 // pred_fallthru
          _
        // Predicated region
        $region41: #{tpu_custom_call.1} parent=35 // pred_check
          %p228 = pneg %p81
        $region42: #{tpu_custom_call.1} parent=35 // pred_check_branch
          %230 = sbr.rel (%p228) target = $region44
        $region43: #{tpu_custom_call.1} parent=35 // pred_region
          %231 = dma.done [#allocation6], 1024
        $region44: #{tpu_custom_call.1} parent=35 // pred_fallthru
          _
        %s232 = sand.u32 %s42, 1
        %s233 = scalar_lea.sflag [#allocation3], %s232
        %s234 = sand.u32 %s42, 1
        %s235 = smul.addr %s234, 128
        %s236 = scalar_lea.vmem [#allocation2], %s235
        %p237 = pneg %p55
        %p238 = pneg %p52
        %p239 = pneg %p81
        %p240 = pneg %p78
        %p241 = pneg %p102
        %p242 = pneg %p99
        %p243 = pneg %p123
        %p244 = pneg %p120
        %p245 = pneg %p151
        %p246 = pneg %p148
        %s247 = sand.u32 %s138, 1
        %s248 = scalar_lea.sflag [#allocation4], %s247
        %s249 = sand.u32 %s138, 1
        %s250 = smul.addr %s249, 256
        %s251 = scalar_lea.vmem [#allocation7], %s250
        %s252 = smul.u32 32, %s26
        %s253 = smul.u32 32, %s26
        %s255 = smul.u32 %s27, 128
        %v256 = vld [vmem:[%s223] sm:$0xf]
        %v257 = vld [vmem:[%s223 + $0x4] sm:$0xf]
        %v258 = vld [vmem:[%s223 + $0x8] sm:$0xf]
        %v259 = vld [vmem:[%s223 + $0xc] sm:$0xf]
        %v260 = vld [vmem:[%s223 + $0x10] sm:$0xf]
        %v261 = vld [vmem:[%s223 + $0x14] sm:$0xf]
        %v262 = vld [vmem:[%s223 + $0x18] sm:$0xf]
        %v263 = vld [vmem:[%s223 + $0x1c] sm:$0xf]
        %v264 = vld [vmem:[%s223 + $0x20] sm:$0xf]
        %v265 = vld [vmem:[%s223 + $0x24] sm:$0xf]
        %v266 = vld [vmem:[%s223 + $0x28] sm:$0xf]
        %v267 = vld [vmem:[%s223 + $0x2c] sm:$0xf]
        %v268 = vld [vmem:[%s223 + $0x30] sm:$0xf]
        %v269 = vld [vmem:[%s223 + $0x34] sm:$0xf]
        %v270 = vld [vmem:[%s223 + $0x38] sm:$0xf]
        %v271 = vld [vmem:[%s223 + $0x3c] sm:$0xf]
        %v272 = vld [vmem:[%s223 + $0x40] sm:$0xf]
        %v273 = vld [vmem:[%s223 + $0x44] sm:$0xf]
        %v274 = vld [vmem:[%s223 + $0x48] sm:$0xf]
        %v275 = vld [vmem:[%s223 + $0x4c] sm:$0xf]
        %v276 = vld [vmem:[%s223 + $0x50] sm:$0xf]
        %v277 = vld [vmem:[%s223 + $0x54] sm:$0xf]
        %v278 = vld [vmem:[%s223 + $0x58] sm:$0xf]
        %v279 = vld [vmem:[%s223 + $0x5c] sm:$0xf]
        %v280 = vld [vmem:[%s223 + $0x60] sm:$0xf]
        %v281 = vld [vmem:[%s223 + $0x64] sm:$0xf]
        %v282 = vld [vmem:[%s223 + $0x68] sm:$0xf]
        %v283 = vld [vmem:[%s223 + $0x6c] sm:$0xf]
        %v284 = vld [vmem:[%s223 + $0x70] sm:$0xf]
        %v285 = vld [vmem:[%s223 + $0x74] sm:$0xf]
        %v286 = vld [vmem:[%s223 + $0x78] sm:$0xf]
        %v287 = vld [vmem:[%s223 + $0x7c] sm:$0xf]
        %v288 = vld [vmem:[#allocation5] sm:$0xf]
        %v289 = vld [vmem:[#allocation5 + $0x4] sm:$0xf]
        %v290 = vld [vmem:[#allocation5 + $0x8] sm:$0xf]
        %v291 = vld [vmem:[#allocation5 + $0xc] sm:$0xf]
        %v292 = vld [vmem:[#allocation5 + $0x10] sm:$0xf]
        %v293 = vld [vmem:[#allocation5 + $0x14] sm:$0xf]
        %v294 = vld [vmem:[#allocation5 + $0x18] sm:$0xf]
        %v295 = vld [vmem:[#allocation5 + $0x1c] sm:$0xf]
        %v296 = vld [vmem:[#allocation5 + $0x20] sm:$0xf]
        %v297 = vld [vmem:[#allocation5 + $0x24] sm:$0xf]
        %v298 = vld [vmem:[#allocation5 + $0x28] sm:$0xf]
        %v299 = vld [vmem:[#allocation5 + $0x2c] sm:$0xf]
        %v300 = vld [vmem:[#allocation5 + $0x30] sm:$0xf]
        %v301 = vld [vmem:[#allocation5 + $0x34] sm:$0xf]
        %v302 = vld [vmem:[#allocation5 + $0x38] sm:$0xf]
        %v303 = vld [vmem:[#allocation5 + $0x3c] sm:$0xf]
        %v336 = vunpack.c.l.b16 %v256
        %v337 = vunpack.c.l.b16 %v257
        %v338 = vunpack.c.l.b16 %v258
        %v339 = vunpack.c.l.b16 %v259
        %v340 = vunpack.c.l.b16 %v260
        %v341 = vunpack.c.l.b16 %v261
        %v342 = vunpack.c.l.b16 %v262
        %v343 = vunpack.c.l.b16 %v263
        %v344 = vunpack.c.l.b16 %v264
        %v345 = vunpack.c.l.b16 %v265
        %v346 = vunpack.c.l.b16 %v266
        %v347 = vunpack.c.l.b16 %v267
        %v348 = vunpack.c.l.b16 %v268
        %v349 = vunpack.c.l.b16 %v269
        %v350 = vunpack.c.l.b16 %v270
        %v351 = vunpack.c.l.b16 %v271
        %v352 = vunpack.c.l.b16 %v272
        %v353 = vunpack.c.l.b16 %v273
        %v354 = vunpack.c.l.b16 %v274
        %v355 = vunpack.c.l.b16 %v275
        %v356 = vunpack.c.l.b16 %v276
        %v357 = vunpack.c.l.b16 %v277
        %v358 = vunpack.c.l.b16 %v278
        %v359 = vunpack.c.l.b16 %v279
        %v360 = vunpack.c.l.b16 %v280
        %v361 = vunpack.c.l.b16 %v281
        %v362 = vunpack.c.l.b16 %v282
        %v363 = vunpack.c.l.b16 %v283
        %v364 = vunpack.c.l.b16 %v284
        %v365 = vunpack.c.l.b16 %v285
        %v366 = vunpack.c.l.b16 %v286
        %v367 = vunpack.c.l.b16 %v287
        %v368 = vpack.c.b16 %v337, %v336
        %v369 = vpack.c.b16 %v339, %v338
        %v370 = vpack.c.b16 %v341, %v340
        %v371 = vpack.c.b16 %v343, %v342
        %v372 = vpack.c.b16 %v345, %v344
        %v373 = vpack.c.b16 %v347, %v346
        %v374 = vpack.c.b16 %v349, %v348
        %v375 = vpack.c.b16 %v351, %v350
        %v376 = vpack.c.b16 %v353, %v352
        %v377 = vpack.c.b16 %v355, %v354
        %v378 = vpack.c.b16 %v357, %v356
        %v379 = vpack.c.b16 %v359, %v358
        %v380 = vpack.c.b16 %v361, %v360
        %v381 = vpack.c.b16 %v363, %v362
        %v382 = vpack.c.b16 %v365, %v364
        %v383 = vpack.c.b16 %v367, %v366
        %v416 = vunpack.c.l.b16 %v288
        %v417 = vunpack.c.l.b16 %v289
        %v418 = vunpack.c.l.b16 %v290
        %v419 = vunpack.c.l.b16 %v291
        %v420 = vunpack.c.l.b16 %v292
        %v421 = vunpack.c.l.b16 %v293
        %v422 = vunpack.c.l.b16 %v294
        %v423 = vunpack.c.l.b16 %v295
        %v424 = vunpack.c.l.b16 %v296
        %v425 = vunpack.c.l.b16 %v297
        %v426 = vunpack.c.l.b16 %v298
        %v427 = vunpack.c.l.b16 %v299
        %v428 = vunpack.c.l.b16 %v300
        %v429 = vunpack.c.l.b16 %v301
        %v430 = vunpack.c.l.b16 %v302
        %v431 = vunpack.c.l.b16 %v303
        %v432 = vpack.c.b16 %v417, %v416
        %v433 = vpack.c.b16 %v419, %v418
        %v434 = vpack.c.b16 %v421, %v420
        %v435 = vpack.c.b16 %v423, %v422
        %v436 = vpack.c.b16 %v425, %v424
        %v437 = vpack.c.b16 %v427, %v426
        %v438 = vpack.c.b16 %v429, %v428
        %v439 = vpack.c.b16 %v431, %v430
        %448 = vmatprep.subr.bf16.mxu0 0
        %449 = vmatpush1.bf16.msra.mxu0 %v439
        %450 = vmatprep.subr.bf16.mxu0 0
        %451 = vmatpush1.bf16.msra.mxu0 %v438
        %452 = vmatprep.subr.bf16.mxu0 0
        %453 = vmatpush1.bf16.msra.mxu0 %v437
        %454 = vmatprep.subr.bf16.mxu0 0
        %455 = vmatpush1.bf16.msra.mxu0 %v436
        %456 = vmatprep.subr.bf16.mxu0 0
        %457 = vmatpush1.bf16.msra.mxu0 %v435
        %458 = vmatprep.subr.bf16.mxu0 0
        %459 = vmatpush1.bf16.msra.mxu0 %v434
        %460 = vmatprep.subr.bf16.mxu0 0
        %461 = vmatpush1.bf16.msra.mxu0 %v433
        %462 = vmatprep.subr.bf16.mxu0 0
        %463 = vmatpush1.bf16.msra.mxu0 %v432
        %464 = vmatprep.subr.bf16.mxu0 0
        %465 = vmatpush2.bf16.msra.mxu0 0
        %466 = vmatprep.subr.bf16.mxu0 0
        %467 = vmatpush2.bf16.msra.mxu0 0
        %468 = vmatprep.subr.bf16.mxu0 0
        %469 = vmatpush2.bf16.msra.mxu0 0
        %470 = vmatprep.subr.bf16.mxu0 0
        %471 = vmatpush2.bf16.msra.mxu0 0
        %472 = vmatprep.subr.bf16.mxu0 0
        %473 = vmatpush2.bf16.msra.mxu0 0
        %474 = vmatprep.subr.bf16.mxu0 0
        %475 = vmatpush2.bf16.msra.mxu0 0
        %476 = vmatprep.subr.bf16.mxu0 0
        %477 = vmatpush2.bf16.msra.mxu0 0
        %478 = vmatprep.subr.bf16.mxu0 0
        %479 = vmatpush2.bf16.msra.mxu0 0
        %480 = vmatprep.mubr.bf16.mxu0 0
        %481 = vmatmul.mubr.bf16.gmra.mxu0 %v368
        %v482 = vpop.f32.mrf.mxu0
        %v483 = vadd.f32 0.0, %v482
        %v484 = vpop.f32.mrf.mxu0
        %v485 = vpop.f32.mrf.mxu0
        %v486 = vadd.f32 0.0, %v485
        %v487 = vpop.f32.mrf.mxu0
        %488 = vmatprep.mubr.bf16.mxu0 0
        %489 = vmatmul.mubr.bf16.gmra.mxu0 %v369
        %v490 = vpop.f32.mrf.mxu0
        %v491 = vadd.f32 0.0, %v490
        %v492 = vpop.f32.mrf.mxu0
        %v493 = vpop.f32.mrf.mxu0
        %v494 = vadd.f32 0.0, %v493
        %v495 = vpop.f32.mrf.mxu0
        %496 = vmatprep.mubr.bf16.mxu0 0
        %497 = vmatmul.mubr.bf16.gmra.mxu0 %v370
        %v498 = vpop.f32.mrf.mxu0
        %v499 = vadd.f32 0.0, %v498
        %v500 = vpop.f32.mrf.mxu0
        %v501 = vpop.f32.mrf.mxu0
        %v502 = vadd.f32 0.0, %v501
        %v503 = vpop.f32.mrf.mxu0
        %504 = vmatprep.mubr.bf16.mxu0 0
        %505 = vmatmul.mubr.bf16.gmra.mxu0 %v371
        %v506 = vpop.f32.mrf.mxu0
        %v507 = vadd.f32 0.0, %v506
        %v508 = vpop.f32.mrf.mxu0
        %v509 = vpop.f32.mrf.mxu0
        %v510 = vadd.f32 0.0, %v509
        %v511 = vpop.f32.mrf.mxu0
        %512 = vmatprep.mubr.bf16.mxu0 0
        %513 = vmatmul.mubr.bf16.gmra.mxu0 %v372
        %v514 = vpop.f32.mrf.mxu0
        %v515 = vadd.f32 0.0, %v514
        %v516 = vpop.f32.mrf.mxu0
        %v517 = vpop.f32.mrf.mxu0
        %v518 = vadd.f32 0.0, %v517
        %v519 = vpop.f32.mrf.mxu0
        %520 = vmatprep.mubr.bf16.mxu0 0
        %521 = vmatmul.mubr.bf16.gmra.mxu0 %v373
        %v522 = vpop.f32.mrf.mxu0
        %v523 = vadd.f32 0.0, %v522
        %v524 = vpop.f32.mrf.mxu0
        %v525 = vpop.f32.mrf.mxu0
        %v526 = vadd.f32 0.0, %v525
        %v527 = vpop.f32.mrf.mxu0
        %528 = vmatprep.mubr.bf16.mxu0 0
        %529 = vmatmul.mubr.bf16.gmra.mxu0 %v374
        %v530 = vpop.f32.mrf.mxu0
        %v531 = vadd.f32 0.0, %v530
        %v532 = vpop.f32.mrf.mxu0
        %v533 = vpop.f32.mrf.mxu0
        %v534 = vadd.f32 0.0, %v533
        %v535 = vpop.f32.mrf.mxu0
        %536 = vmatprep.mubr.bf16.mxu0 0
        %537 = vmatmul.mubr.bf16.gmra.mxu0 %v375
        %v538 = vpop.f32.mrf.mxu0
        %v539 = vadd.f32 0.0, %v538
        %v540 = vpop.f32.mrf.mxu0
        %v541 = vpop.f32.mrf.mxu0
        %v542 = vadd.f32 0.0, %v541
        %v543 = vpop.f32.mrf.mxu0
        %544 = vmatprep.mubr.bf16.mxu0 0
        %545 = vmatmul.mubr.bf16.gmra.mxu0 %v376
        %v546 = vpop.f32.mrf.mxu0
        %v547 = vadd.f32 0.0, %v546
        %v548 = vpop.f32.mrf.mxu0
        %v549 = vpop.f32.mrf.mxu0
        %v550 = vadd.f32 0.0, %v549
        %v551 = vpop.f32.mrf.mxu0
        %552 = vmatprep.mubr.bf16.mxu0 0
        %553 = vmatmul.mubr.bf16.gmra.mxu0 %v377
        %v554 = vpop.f32.mrf.mxu0
        %v555 = vadd.f32 0.0, %v554
        %v556 = vpop.f32.mrf.mxu0
        %v557 = vpop.f32.mrf.mxu0
        %v558 = vadd.f32 0.0, %v557
        %v559 = vpop.f32.mrf.mxu0
        %560 = vmatprep.mubr.bf16.mxu0 0
        %561 = vmatmul.mubr.bf16.gmra.mxu0 %v378
        %v562 = vpop.f32.mrf.mxu0
        %v563 = vadd.f32 0.0, %v562
        %v564 = vpop.f32.mrf.mxu0
        %v565 = vpop.f32.mrf.mxu0
        %v566 = vadd.f32 0.0, %v565
        %v567 = vpop.f32.mrf.mxu0
        %568 = vmatprep.mubr.bf16.mxu0 0
        %569 = vmatmul.mubr.bf16.gmra.mxu0 %v379
        %v570 = vpop.f32.mrf.mxu0
        %v571 = vadd.f32 0.0, %v570
        %v572 = vpop.f32.mrf.mxu0
        %v573 = vpop.f32.mrf.mxu0
        %v574 = vadd.f32 0.0, %v573
        %v575 = vpop.f32.mrf.mxu0
        %576 = vmatprep.mubr.bf16.mxu0 0
        %577 = vmatmul.mubr.bf16.gmra.mxu0 %v380
        %v578 = vpop.f32.mrf.mxu0
        %v579 = vadd.f32 0.0, %v578
        %v580 = vpop.f32.mrf.mxu0
        %v581 = vpop.f32.mrf.mxu0
        %v582 = vadd.f32 0.0, %v581
        %v583 = vpop.f32.mrf.mxu0
        %584 = vmatprep.mubr.bf16.mxu0 0
        %585 = vmatmul.mubr.bf16.gmra.mxu0 %v381
        %v586 = vpop.f32.mrf.mxu0
        %v587 = vadd.f32 0.0, %v586
        %v588 = vpop.f32.mrf.mxu0
        %v589 = vpop.f32.mrf.mxu0
        %v590 = vadd.f32 0.0, %v589
        %v591 = vpop.f32.mrf.mxu0
        %592 = vmatprep.mubr.bf16.mxu0 0
        %593 = vmatmul.mubr.bf16.gmra.mxu0 %v382
        %v594 = vpop.f32.mrf.mxu0
        %v595 = vadd.f32 0.0, %v594
        %v596 = vpop.f32.mrf.mxu0
        %v597 = vpop.f32.mrf.mxu0
        %v598 = vadd.f32 0.0, %v597
        %v599 = vpop.f32.mrf.mxu0
        %600 = vmatprep.mubr.bf16.mxu0 0
        %601 = vmatmul.mubr.bf16.gmra.mxu0 %v383
        %v602 = vpop.f32.mrf.mxu0
        %v603 = vadd.f32 0.0, %v602
        %v604 = vpop.f32.mrf.mxu0
        %v605 = vpop.f32.mrf.mxu0
        %v606 = vadd.f32 0.0, %v605
        %v607 = vpop.f32.mrf.mxu0
        %608 = vdwg.mxu0
        %s609 = sshra.s32 %s255, 7
        %s610 = sand.u32 %s255, 127
        %s611 = scalar_lea.vmem %s2, %s609
        %v612 = vld [vmem:[%s611] sm:$0x1]
        %v614 = vlaneseq
        %v615 = vshrl.u32 %v614, 7
        %v616 = vsub.s32 0, %v615
        %v617 = vrot.slane %v612, %v616
        %v619 = vmul.f32 %v483, %v617
        %v620 = vmul.f32 %v486, %v617
        %v621 = vmul.f32 %v491, %v617
        %v622 = vmul.f32 %v494, %v617
        %v623 = vmul.f32 %v499, %v617
        %v624 = vmul.f32 %v502, %v617
        %v625 = vmul.f32 %v507, %v617
        %v626 = vmul.f32 %v510, %v617
        %v627 = vmul.f32 %v515, %v617
        %v628 = vmul.f32 %v518, %v617
        %v629 = vmul.f32 %v523, %v617
        %v630 = vmul.f32 %v526, %v617
        %v631 = vmul.f32 %v531, %v617
        %v632 = vmul.f32 %v534, %v617
        %v633 = vmul.f32 %v539, %v617
        %v634 = vmul.f32 %v542, %v617
        %v635 = vmul.f32 %v547, %v617
        %v636 = vmul.f32 %v550, %v617
        %v637 = vmul.f32 %v555, %v617
        %v638 = vmul.f32 %v558, %v617
        %v639 = vmul.f32 %v563, %v617
        %v640 = vmul.f32 %v566, %v617
        %v641 = vmul.f32 %v571, %v617
        %v642 = vmul.f32 %v574, %v617
        %v643 = vmul.f32 %v579, %v617
        %v644 = vmul.f32 %v582, %v617
        %v645 = vmul.f32 %v587, %v617
        %v646 = vmul.f32 %v590, %v617
        %v647 = vmul.f32 %v595, %v617
        %v648 = vmul.f32 %v598, %v617
        %v649 = vmul.f32 %v603, %v617
        %v650 = vmul.f32 %v606, %v617
        %s651 = scalar_lea.vmem %s3, %s609
        %v652 = vld [vmem:[%s651] sm:$0x1]
        %v654 = vlaneseq
        %v655 = vshrl.u32 %v654, 7
        %v656 = vsub.s32 0, %v655
        %v657 = vrot.slane %v652, %v656
        %v659 = vadd.f32 %v619, %v657
        %v660 = vadd.f32 %v620, %v657
        %v661 = vadd.f32 %v621, %v657
        %v662 = vadd.f32 %v622, %v657
        %v663 = vadd.f32 %v623, %v657
        %v664 = vadd.f32 %v624, %v657
        %v665 = vadd.f32 %v625, %v657
        %v666 = vadd.f32 %v626, %v657
        %v667 = vadd.f32 %v627, %v657
        %v668 = vadd.f32 %v628, %v657
        %v669 = vadd.f32 %v629, %v657
        %v670 = vadd.f32 %v630, %v657
        %v671 = vadd.f32 %v631, %v657
        %v672 = vadd.f32 %v632, %v657
        %v673 = vadd.f32 %v633, %v657
        %v674 = vadd.f32 %v634, %v657
        %v675 = vadd.f32 %v635, %v657
        %v676 = vadd.f32 %v636, %v657
        %v677 = vadd.f32 %v637, %v657
        %v678 = vadd.f32 %v638, %v657
        %v679 = vadd.f32 %v639, %v657
        %v680 = vadd.f32 %v640, %v657
        %v681 = vadd.f32 %v641, %v657
        %v682 = vadd.f32 %v642, %v657
        %v683 = vadd.f32 %v643, %v657
        %v684 = vadd.f32 %v644, %v657
        %v685 = vadd.f32 %v645, %v657
        %v686 = vadd.f32 %v646, %v657
        %v687 = vadd.f32 %v647, %v657
        %v688 = vadd.f32 %v648, %v657
        %v689 = vadd.f32 %v649, %v657
        %v690 = vadd.f32 %v650, %v657
        %v691 = vmax.f32 %v659, 0.0
        %v692 = vmax.f32 %v660, 0.0
        %v693 = vmax.f32 %v661, 0.0
        %v694 = vmax.f32 %v662, 0.0
        %v695 = vmax.f32 %v663, 0.0
        %v696 = vmax.f32 %v664, 0.0
        %v697 = vmax.f32 %v665, 0.0
        %v698 = vmax.f32 %v666, 0.0
        %v699 = vmax.f32 %v667, 0.0
        %v700 = vmax.f32 %v668, 0.0
        %v701 = vmax.f32 %v669, 0.0
        %v702 = vmax.f32 %v670, 0.0
        %v703 = vmax.f32 %v671, 0.0
        %v704 = vmax.f32 %v672, 0.0
        %v705 = vmax.f32 %v673, 0.0
        %v706 = vmax.f32 %v674, 0.0
        %v707 = vmax.f32 %v675, 0.0
        %v708 = vmax.f32 %v676, 0.0
        %v709 = vmax.f32 %v677, 0.0
        %v710 = vmax.f32 %v678, 0.0
        %v711 = vmax.f32 %v679, 0.0
        %v712 = vmax.f32 %v680, 0.0
        %v713 = vmax.f32 %v681, 0.0
        %v714 = vmax.f32 %v682, 0.0
        %v715 = vmax.f32 %v683, 0.0
        %v716 = vmax.f32 %v684, 0.0
        %v717 = vmax.f32 %v685, 0.0
        %v718 = vmax.f32 %v686, 0.0
        %v719 = vmax.f32 %v687, 0.0
        %v720 = vmax.f32 %v688, 0.0
        %v721 = vmax.f32 %v689, 0.0
        %v722 = vmax.f32 %v690, 0.0
        %723 = vst [vmem:[%s251] sm:$0xff] %v691
        %724 = vst [vmem:[%s251 + $0x8] sm:$0xff] %v692
        %725 = vst [vmem:[%s251 + $0x10] sm:$0xff] %v693
        %726 = vst [vmem:[%s251 + $0x18] sm:$0xff] %v694
        %727 = vst [vmem:[%s251 + $0x20] sm:$0xff] %v695
        %728 = vst [vmem:[%s251 + $0x28] sm:$0xff] %v696
        %729 = vst [vmem:[%s251 + $0x30] sm:$0xff] %v697
        %730 = vst [vmem:[%s251 + $0x38] sm:$0xff] %v698
        %731 = vst [vmem:[%s251 + $0x40] sm:$0xff] %v699
        %732 = vst [vmem:[%s251 + $0x48] sm:$0xff] %v700
        %733 = vst [vmem:[%s251 + $0x50] sm:$0xff] %v701
        %734 = vst [vmem:[%s251 + $0x58] sm:$0xff] %v702
        %735 = vst [vmem:[%s251 + $0x60] sm:$0xff] %v703
        %736 = vst [vmem:[%s251 + $0x68] sm:$0xff] %v704
        %737 = vst [vmem:[%s251 + $0x70] sm:$0xff] %v705
        %738 = vst [vmem:[%s251 + $0x78] sm:$0xff] %v706
        %739 = vst [vmem:[%s251 + $0x80] sm:$0xff] %v707
        %740 = vst [vmem:[%s251 + $0x88] sm:$0xff] %v708
        %741 = vst [vmem:[%s251 + $0x90] sm:$0xff] %v709
        %742 = vst [vmem:[%s251 + $0x98] sm:$0xff] %v710
        %743 = vst [vmem:[%s251 + $0xa0] sm:$0xff] %v711
        %744 = vst [vmem:[%s251 + $0xa8] sm:$0xff] %v712
        %745 = vst [vmem:[%s251 + $0xb0] sm:$0xff] %v713
        %746 = vst [vmem:[%s251 + $0xb8] sm:$0xff] %v714
        %747 = vst [vmem:[%s251 + $0xc0] sm:$0xff] %v715
        %748 = vst [vmem:[%s251 + $0xc8] sm:$0xff] %v716
        %749 = vst [vmem:[%s251 + $0xd0] sm:$0xff] %v717
        %750 = vst [vmem:[%s251 + $0xd8] sm:$0xff] %v718
        %751 = vst [vmem:[%s251 + $0xe0] sm:$0xff] %v719
        %752 = vst [vmem:[%s251 + $0xe8] sm:$0xff] %v720
        %753 = vst [vmem:[%s251 + $0xf0] sm:$0xff] %v721
        %754 = vst [vmem:[%s251 + $0xf8] sm:$0xff] %v722
        %s755 = sand.u32 %s138, 1
        %s756 = scalar_lea.sflag [#allocation4], %s755
        %s757 = sand.u32 %s138, 1
        %s758 = smul.addr %s757, 256
        %s759 = scalar_lea.vmem [#allocation7], %s758
        // Predicated region
        $region45: #{tpu_custom_call.1} parent=35 // pred_check
          %p760 = pneg %p148
        $region46: #{tpu_custom_call.1} parent=35 // pred_check_branch
          %762 = sbr.rel (%p760) target = $region48
        $region47: #{tpu_custom_call.1} parent=35 // pred_region
          %s763 = smul.u32 32, %s26
          %s765 = ssub.s32 4096, 4096
          %766 = vsyncadd %s756, %s765
          %s767 = sadd.s32 %s27, %s763
          %s768 = smul.addr %s767, 128
          %s769 = scalar_lea.hbm %s4, %s768
          %s770 = sshll.u32 %s759, 4
          %s771 = int_to_ptr.vmem [resolvable:$true] %s770
          %776 = dma.vmem_to_hbm [thread:$0]  %s771, 4096, %s769, %s756, 128, 128, 8
        $region48: #{tpu_custom_call.1} parent=35 // pred_fallthru
          _
      $region36: #{tpu_custom_call.1} parent=5 // pred_fallthru
        _
      %p777 = scmp.le.s32.totalorder 2, %s17
      // Predicated region
      $region49: #{tpu_custom_call.1} parent=5 // pred_check
        %p778 = pneg %p777
      $region50: #{tpu_custom_call.1} parent=5 // pred_check_branch
        %780 = sbr.rel (%p778) target = $region52
      $region51: #{tpu_custom_call.1} parent=5 // pred_region
        %s781 = ssub.s32 %s17, 2
        // Predicated region
        $region53: #{tpu_custom_call.1} parent=51 // pred_check
          %p782 = pneg %p154
        $region54: #{tpu_custom_call.1} parent=51 // pred_check_branch
          %784 = sbr.rel (%p782) target = $region56
        $region55: #{tpu_custom_call.1} parent=51 // pred_region
          %s785 = sand.u32 %s139, 1
          %s786 = scalar_lea.sflag [#allocation4], %s785
          %s787 = sand.u32 %s139, 1
          %s788 = smul.addr %s787, 256
          %s789 = scalar_lea.vmem [#allocation7], %s788
          %790 = dma.done %s786, 4096
        $region56: #{tpu_custom_call.1} parent=51 // pred_fallthru
          _
      $region52: #{tpu_custom_call.1} parent=5 // pred_fallthru
        _
    $region6: #{tpu_custom_call.1} parent=1 // loop_footer
      %s21 = sadd.s32 1, %s17
    $region7: #{tpu_custom_call.1} parent=1 // loop_footer_branch
      %16 = sbr.rel target = $region3
    $region8: #{tpu_custom_call.1} parent=1 // loop_exit
      _
    %791 = vsyncpa [#allocation3], 1
    %s792 = scalar_lea.sflag [#allocation3], 1
    %793 = vsyncpa %s792, 1
    %794 = vsyncpa [#allocation6], 1
    %795 = vsyncpa [#allocation4], 1
    %s796 = scalar_lea.sflag [#allocation4], 1
    %797 = vsyncpa %s796, 1

</llo_original>
